<compile_context>
chip_gen: v5e
topology: v5e:2x2
jax: 0.10.0
libtpu: 0.0.40
codegen_flags: <defaults>
</compile_context>

<pallas_src>
import jax
import jax.numpy as jnp
from jax.experimental import pallas as pl
from jax.experimental.pallas import tpu as pltpu

LANE = 128  # TPU lane width; output is padded to this for lane-dense stores.


def encoder_kernel(x_ref, w1_ref, b1_ref, w2_ref, b2_ref, w3_ref, b3_ref, o_ref):
    # Whole problem (~25 KiB) lives in VMEM; fuse all three layers.
    x = x_ref[...]          # (B, 1)  f32
    w1 = w1_ref[...]        # (1, L)  f32
    b1 = b1_ref[...]        # (1, L)  f32

    # --- fc1 + sigmoid: K=1 matmul == broadcasted outer product (VPU only,
    #     avoids an MXU push/pop round-trip for ~3 KFLOP) ---
    h1 = jax.nn.sigmoid(x * w1 + b1)                       # (B, L) f32

    # --- fc2 + relu: MXU, bf16 operands, f32 accumulation ---
    h2 = jnp.dot(h1.astype(jnp.bfloat16), w2_ref[...],
                 preferred_element_type=jnp.float32) + b2_ref[...]
    h2 = jnp.maximum(h2, 0.0)                              # (B, L) f32

    # --- fc3: MXU, bf16 operands, f32 accumulation; N padded to 128 lanes so
    #     the output store is full-vreg (no masked partial stores) ---
    out = jnp.dot(h2.astype(jnp.bfloat16), w3_ref[...],
                  preferred_element_type=jnp.float32) + b3_ref[...]
    o_ref[...] = out.astype(o_ref.dtype)                   # (B, 128) f32


def encoder_forward(x, w1, b1, w2, b2, w3, b3):
    B, d_in = x.shape
    L = w1.shape[1]
    Lp = max(LANE, L)  # lane-dense output width

    # bf16 weights for the MXU layers (accumulation stays f32 in-kernel).
    w2_bf = w2.astype(jnp.bfloat16)
    # Zero-pad fc3 columns to a full 128-lane register; slice back afterwards.
    w3_bf = jnp.zeros((L, Lp), jnp.bfloat16).at[:, :L].set(w3.astype(jnp.bfloat16))
    b3_p = jnp.zeros((1, Lp), jnp.float32).at[:, :L].set(b3)

    # grid=() -> no tiling to express; untiled VMEM specs give one DMA per
    # operand with no BlockSpec machinery.
    vmem = pl.BlockSpec(memory_space=pltpu.MemorySpace.VMEM)

    cost = pl.CostEstimate(
        flops=2 * B * (d_in * L + L * L + L * Lp),
        transcendentals=B * L,  # sigmoid
        bytes_accessed=(x.size * 4 + w1.size * 4 + b1.size * 4
                        + w2_bf.size * 2 + b2.size * 4
                        + w3_bf.size * 2 + b3_p.size * 4
                        + B * Lp * 4),
    )

    # NOTE: if B ever grows large, add a batch grid axis
    # (grid=(pl.cdiv(B, 512),), block (512, .), dimension_semantics=("parallel",))
    # to shard across v7x's two TensorCores and enable double-buffered input DMA.
    out_padded = pl.pallas_call(
        encoder_kernel,
        out_shape=jax.ShapeDtypeStruct((B, Lp), jnp.float32),
        in_specs=[vmem] * 7,
        out_specs=vmem,
        cost_estimate=cost,
    )(x, w1, b1, w2_bf, b2, w3_bf, b3_p)

    return out_padded[:, :L]


def init_params(key, input_size, latent_size):
    # Deterministic init mimicking PyTorch Linear default:
    # U(-1/sqrt(fan_in), 1/sqrt(fan_in)).
    ks = jax.random.split(key, 6)

    def lin(kw, kb, fan_in, fan_out):
        bound = 1.0 / jnp.sqrt(jnp.float32(fan_in))
        w = jax.random.uniform(kw, (fan_in, fan_out), jnp.float32, -bound, bound)
        b = jax.random.uniform(kb, (1, fan_out), jnp.float32, -bound, bound)
        return w, b

    w1, b1 = lin(ks[0], ks[1], input_size, latent_size)
    w2, b2 = lin(ks[2], ks[3], latent_size, latent_size)
    w3, b3 = lin(ks[4], ks[5], latent_size, latent_size)
    return w1, b1, w2, b2, w3, b3


if __name__ == "__main__":
    batch_size = 100   # matches toy5.py: grid of 100 points in [-1, 1]
    dim_input = 1
    latent_size = 32

    key = jax.random.PRNGKey(0)
    _, kp = jax.random.split(key)

    # Input: the toy script uses np.linspace(-1, 1, batch_size).reshape(B, 1)
    x = jnp.linspace(-1.0, 1.0, batch_size, dtype=jnp.float32).reshape(
        batch_size, dim_input)

    w1, b1, w2, b2, w3, b3 = init_params(kp, dim_input, latent_size)

    out = encoder_forward(x, w1, b1, w2, b2, w3, b3)
    out = jax.block_until_ready(out)
    assert out.shape == (batch_size, latent_size)

    # Reference 1: same dtype transitions as the kernel (bf16 MXU operands,
    # f32 accumulation) -> tight tolerance.
    h1 = jax.nn.sigmoid(x * w1 + b1)
    h2 = jnp.maximum(
        jnp.dot(h1.astype(jnp.bfloat16), w2.astype(jnp.bfloat16),
                preferred_element_type=jnp.float32) + b2, 0.0)
    ref_matched = jnp.dot(h2.astype(jnp.bfloat16), w3.astype(jnp.bfloat16),
                          preferred_element_type=jnp.float32) + b3
    assert jnp.allclose(out, ref_matched, atol=1e-4, rtol=1e-4)

    # Reference 2: pure f32 math (the original PyTorch semantics) -> loose
    # tolerance bounding the bf16 operand rounding.
    ref_f32 = jax.nn.sigmoid(x @ w1 + b1)
    ref_f32 = jnp.maximum(ref_f32 @ w2 + b2, 0.0)
    ref_f32 = ref_f32 @ w3 + b3
    assert jnp.allclose(out, ref_f32, atol=5e-2, rtol=5e-2)

    print("KERNEL_OK")
</pallas_src>

<mosaic_0001>
module attributes {stable_mosaic.version = 11 : i64} {
  func.func @encoder_kernel(%arg0: memref<100x1xf32, #tpu.memory_space<vmem>>, %arg1: memref<1x32xf32, #tpu.memory_space<vmem>>, %arg2: memref<1x32xf32, #tpu.memory_space<vmem>>, %arg3: memref<32x32xbf16, #tpu.memory_space<vmem>>, %arg4: memref<1x32xf32, #tpu.memory_space<vmem>>, %arg5: memref<32x128xbf16, #tpu.memory_space<vmem>>, %arg6: memref<1x128xf32, #tpu.memory_space<vmem>>, %arg7: memref<100x128xf32, #tpu.memory_space<vmem>>) attributes {dimension_semantics = [], scalar_prefetch = 0 : i64, scratch_operands = 0 : i64, tpu.core_type = #tpu.core_type<tc>} {
    %c0 = arith.constant 0 : index
    %c0_0 = arith.constant 0 : index
    %0 = vector.load %arg0[%c0, %c0_0] : memref<100x1xf32, #tpu.memory_space<vmem>>, vector<100x1xf32>
    %c0_1 = arith.constant 0 : index
    %c0_2 = arith.constant 0 : index
    %1 = vector.load %arg1[%c0_1, %c0_2] : memref<1x32xf32, #tpu.memory_space<vmem>>, vector<1x32xf32>
    %c0_3 = arith.constant 0 : index
    %c0_4 = arith.constant 0 : index
    %2 = vector.load %arg2[%c0_3, %c0_4] : memref<1x32xf32, #tpu.memory_space<vmem>>, vector<1x32xf32>
    %3 = vector.broadcast %0 : vector<100x1xf32> to vector<100x32xf32>
    %4 = vector.broadcast %1 : vector<1x32xf32> to vector<100x32xf32>
    %5 = arith.mulf %3, %4 : vector<100x32xf32>
    %6 = vector.broadcast %2 : vector<1x32xf32> to vector<100x32xf32>
    %7 = arith.addf %5, %6 : vector<100x32xf32>
    %8 = arith.negf %7 : vector<100x32xf32>
    %9 = math.exp %8 : vector<100x32xf32>
    %cst = arith.constant 1.000000e+00 : f32
    %10 = vector.broadcast %cst : f32 to vector<100x32xf32>
    %11 = arith.addf %10, %9 : vector<100x32xf32>
    %12 = arith.divf %10, %11 : vector<100x32xf32>
    %13 = arith.truncf %12 : vector<100x32xf32> to vector<100x32xbf16>
    %c0_5 = arith.constant 0 : index
    %c0_6 = arith.constant 0 : index
    %14 = vector.load %arg3[%c0_5, %c0_6] : memref<32x32xbf16, #tpu.memory_space<vmem>>, vector<32x32xbf16>
    %cst_7 = arith.constant dense<0.000000e+00> : vector<100x32xf32>
    %15 = tpu.matmul %13, %14, %cst_7 {dimension_numbers = #tpu.dot_dimension_numbers<[1], [0], [0], [1], [0, 0, 1, 1], [], []>} : vector<100x32xbf16>, vector<32x32xbf16>, vector<100x32xf32> -> vector<100x32xf32>
    %c0_8 = arith.constant 0 : index
    %c0_9 = arith.constant 0 : index
    %16 = vector.load %arg4[%c0_8, %c0_9] : memref<1x32xf32, #tpu.memory_space<vmem>>, vector<1x32xf32>
    %17 = vector.broadcast %16 : vector<1x32xf32> to vector<100x32xf32>
    %18 = arith.addf %15, %17 : vector<100x32xf32>
    %cst_10 = arith.constant 0.000000e+00 : f32
    %19 = vector.broadcast %cst_10 : f32 to vector<100x32xf32>
    %20 = arith.maximumf %18, %19 : vector<100x32xf32>
    %21 = arith.truncf %20 : vector<100x32xf32> to vector<100x32xbf16>
    %c0_11 = arith.constant 0 : index
    %c0_12 = arith.constant 0 : index
    %22 = vector.load %arg5[%c0_11, %c0_12] : memref<32x128xbf16, #tpu.memory_space<vmem>>, vector<32x128xbf16>
    %cst_13 = arith.constant dense<0.000000e+00> : vector<100x128xf32>
    %23 = tpu.matmul %21, %22, %cst_13 {dimension_numbers = #tpu.dot_dimension_numbers<[1], [0], [0], [1], [0, 0, 1, 1], [], []>} : vector<100x32xbf16>, vector<32x128xbf16>, vector<100x128xf32> -> vector<100x128xf32>
    %c0_14 = arith.constant 0 : index
    %c0_15 = arith.constant 0 : index
    %24 = vector.load %arg6[%c0_14, %c0_15] : memref<1x128xf32, #tpu.memory_space<vmem>>, vector<1x128xf32>
    %25 = vector.broadcast %24 : vector<1x128xf32> to vector<100x128xf32>
    %26 = arith.addf %23, %25 : vector<100x128xf32>
    %c0_16 = arith.constant 0 : index
    %c0_17 = arith.constant 0 : index
    %27 = vector.load %arg7[%c0_16, %c0_17] : memref<100x128xf32, #tpu.memory_space<vmem>>, vector<100x128xf32>
    tpu.vector_store %arg7[%c0_16, %c0_17], %26 {strides = array<i32>} : memref<100x128xf32, #tpu.memory_space<vmem>>, vector<100x128xf32>,
    return
  }
}

</mosaic_0001>

<llo_original>
// kernel: tpu_custom_call.1
$region0: #{tpu_custom_call.1}
  #allocation0 [shape = 'u32[]', space=smem, size = 0x4, offset = 0x4, fixed_abs, tag = 'smem constant byte address 0x4 - core index']
  #allocation1 [shape = 'u32[72,128]{1,0:T(1,128)}', space=vmem, size = 0x9000, scoped, tag = 'internal scratch']
  %s0 = inlined_call_operand.vmem [shape: f32[100,1], index: 0, kind: input, shape index: {}]
  %s1 = inlined_call_operand.vmem [shape: f32[1,32], index: 1, kind: input, shape index: {}]
  %s2 = inlined_call_operand.vmem [shape: f32[1,32], index: 2, kind: input, shape index: {}]
  %s3 = inlined_call_operand.vmem [shape: bf16[32,32], index: 3, kind: input, shape index: {}]
  %s4 = inlined_call_operand.vmem [shape: f32[1,32], index: 4, kind: input, shape index: {}]
  %s5 = inlined_call_operand.vmem [shape: bf16[32,128], index: 5, kind: input, shape index: {}]
  %s6 = inlined_call_operand.vmem [shape: f32[1,128], index: 6, kind: input, shape index: {}]
  %s7 = inlined_call_operand.hbm [shape: f32[100,128], index: 7, kind: output, shape index: {}]
  %s8 = sld [smem:[#allocation0]]
  $region38: #{tpu_custom_call.1} parent=0
    _
  %s10 = ssub.s32 1, %s8
  %s11 = scalar_select 0, %s10, %s8
  $region1: #{tpu_custom_call.1} parent=0
    #allocation2 [shape = 'u8[53248]{0}', space=vmem, size = 0xd000, scoped, tag = 'output window, operand 0, single buffered']
    #allocation3 [shape = 's32[1]{0}', space=sflag, size = 0x4, scoped, tag = 'scoped memory for tpu_custom_call.1']
    %12 = vsyncpa [#allocation3], 0
    // Predicated region
    $region2: #{tpu_custom_call.1} parent=1 // pred_check
      _
    $region3: #{tpu_custom_call.1} parent=1 // pred_check_branch
      %14 = sbr.rel (0) target = $region5
    $region4: #{tpu_custom_call.1} parent=1 // pred_region
      _
    $region5: #{tpu_custom_call.1} parent=1 // pred_fallthru
      _
    // Predicated region
    $region6: #{tpu_custom_call.1} parent=1 // pred_check
      _
    $region7: #{tpu_custom_call.1} parent=1 // pred_check_branch
      %16 = sbr.rel (0) target = $region9
    $region8: #{tpu_custom_call.1} parent=1 // pred_region
      _
    $region9: #{tpu_custom_call.1} parent=1 // pred_fallthru
      _
    // Predicated region
    $region10: #{tpu_custom_call.1} parent=1 // pred_check
      _
    $region11: #{tpu_custom_call.1} parent=1 // pred_check_branch
      %18 = sbr.rel (0) target = $region13
    $region12: #{tpu_custom_call.1} parent=1 // pred_region
      _
    $region13: #{tpu_custom_call.1} parent=1 // pred_fallthru
      _
    // Predicated region
    $region14: #{tpu_custom_call.1} parent=1 // pred_check
      _
    $region15: #{tpu_custom_call.1} parent=1 // pred_check_branch
      %20 = sbr.rel (0) target = $region17
    $region16: #{tpu_custom_call.1} parent=1 // pred_region
      _
    $region17: #{tpu_custom_call.1} parent=1 // pred_fallthru
      _
    // Predicated region
    $region18: #{tpu_custom_call.1} parent=1 // pred_check
      _
    $region19: #{tpu_custom_call.1} parent=1 // pred_check_branch
      %22 = sbr.rel (0) target = $region21
    $region20: #{tpu_custom_call.1} parent=1 // pred_region
      _
    $region21: #{tpu_custom_call.1} parent=1 // pred_fallthru
      _
    // Predicated region
    $region22: #{tpu_custom_call.1} parent=1 // pred_check
      _
    $region23: #{tpu_custom_call.1} parent=1 // pred_check_branch
      %24 = sbr.rel (0) target = $region25
    $region24: #{tpu_custom_call.1} parent=1 // pred_region
      _
    $region25: #{tpu_custom_call.1} parent=1 // pred_fallthru
      _
    // Predicated region
    $region26: #{tpu_custom_call.1} parent=1 // pred_check
      _
    $region27: #{tpu_custom_call.1} parent=1 // pred_check_branch
      %26 = sbr.rel (0) target = $region29
    $region28: #{tpu_custom_call.1} parent=1 // pred_region
      _
    $region29: #{tpu_custom_call.1} parent=1 // pred_fallthru
      _
    %v28 = vld [vmem:[%s0] sm:$0xff]
    %v29 = vld [vmem:[%s0 + $0x8] sm:$0xff]
    %v30 = vld [vmem:[%s0 + $0x10] sm:$0xff]
    %v31 = vld [vmem:[%s0 + $0x18] sm:$0xff]
    %v32 = vld [vmem:[%s0 + $0x20] sm:$0xff]
    %v33 = vld [vmem:[%s0 + $0x28] sm:$0xff]
    %v34 = vld [vmem:[%s0 + $0x30] sm:$0xff]
    %v35 = vld [vmem:[%s0 + $0x38] sm:$0xff]
    %v36 = vld [vmem:[%s0 + $0x40] sm:$0xff]
    %v37 = vld [vmem:[%s0 + $0x48] sm:$0xff]
    %v38 = vld [vmem:[%s0 + $0x50] sm:$0xff]
    %v39 = vld [vmem:[%s0 + $0x58] sm:$0xff]
    %v40 = vld [vmem:[%s0 + $0x60] sm:$0xf]
    %v41 = vld [vmem:[%s1] sm:$0x1]
    %v42 = vld [vmem:[%s2] sm:$0x1]
    %44 = vset.pattern.permute.xlu0 0
    %45 = vperm.xlu0 %44, %v28
    %v46 = vpop.permute.xlu0 %45
    %49 = vset.pattern.permute.xlu0 0
    %50 = vperm.xlu0 %49, %v29
    %v51 = vpop.permute.xlu0 %50
    %54 = vset.pattern.permute.xlu0 0
    %55 = vperm.xlu0 %54, %v30
    %v56 = vpop.permute.xlu0 %55
    %59 = vset.pattern.permute.xlu0 0
    %60 = vperm.xlu0 %59, %v31
    %v61 = vpop.permute.xlu0 %60
    %64 = vset.pattern.permute.xlu0 0
    %65 = vperm.xlu0 %64, %v32
    %v66 = vpop.permute.xlu0 %65
    %69 = vset.pattern.permute.xlu0 0
    %70 = vperm.xlu0 %69, %v33
    %v71 = vpop.permute.xlu0 %70
    %74 = vset.pattern.permute.xlu0 0
    %75 = vperm.xlu0 %74, %v34
    %v76 = vpop.permute.xlu0 %75
    %79 = vset.pattern.permute.xlu0 0
    %80 = vperm.xlu0 %79, %v35
    %v81 = vpop.permute.xlu0 %80
    %84 = vset.pattern.permute.xlu0 0
    %85 = vperm.xlu0 %84, %v36
    %v86 = vpop.permute.xlu0 %85
    %89 = vset.pattern.permute.xlu0 0
    %90 = vperm.xlu0 %89, %v37
    %v91 = vpop.permute.xlu0 %90
    %94 = vset.pattern.permute.xlu0 0
    %95 = vperm.xlu0 %94, %v38
    %v96 = vpop.permute.xlu0 %95
    %99 = vset.pattern.permute.xlu0 0
    %100 = vperm.xlu0 %99, %v39
    %v101 = vpop.permute.xlu0 %100
    %104 = vset.pattern.permute.xlu0 0
    %105 = vperm.xlu0 %104, %v40
    %v106 = vpop.permute.xlu0 %105
    %v109 = vperm.slane %v41, 0
    %v111 = vmul.f32 %v46, %v109
    %v112 = vmul.f32 %v51, %v109
    %v113 = vmul.f32 %v56, %v109
    %v114 = vmul.f32 %v61, %v109
    %v115 = vmul.f32 %v66, %v109
    %v116 = vmul.f32 %v71, %v109
    %v117 = vmul.f32 %v76, %v109
    %v118 = vmul.f32 %v81, %v109
    %v119 = vmul.f32 %v86, %v109
    %v120 = vmul.f32 %v91, %v109
    %v121 = vmul.f32 %v96, %v109
    %v122 = vmul.f32 %v101, %v109
    %v123 = vmul.f32 %v106, %v109
    %v125 = vperm.slane %v42, 0
    %v127 = vadd.f32 %v111, %v125
    %v128 = vadd.f32 %v112, %v125
    %v129 = vadd.f32 %v113, %v125
    %v130 = vadd.f32 %v114, %v125
    %v131 = vadd.f32 %v115, %v125
    %v132 = vadd.f32 %v116, %v125
    %v133 = vadd.f32 %v117, %v125
    %v134 = vadd.f32 %v118, %v125
    %v135 = vadd.f32 %v119, %v125
    %v136 = vadd.f32 %v120, %v125
    %v137 = vadd.f32 %v121, %v125
    %v138 = vadd.f32 %v122, %v125
    %v139 = vadd.f32 %v123, %v125
    %v140 = vxor.u32 %v127, 2147483648
    %v141 = vxor.u32 %v128, 2147483648
    %v142 = vxor.u32 %v129, 2147483648
    %v143 = vxor.u32 %v130, 2147483648
    %v144 = vxor.u32 %v131, 2147483648
    %v145 = vxor.u32 %v132, 2147483648
    %v146 = vxor.u32 %v133, 2147483648
    %v147 = vxor.u32 %v134, 2147483648
    %v148 = vxor.u32 %v135, 2147483648
    %v149 = vxor.u32 %v136, 2147483648
    %v150 = vxor.u32 %v137, 2147483648
    %v151 = vxor.u32 %v138, 2147483648
    %v152 = vxor.u32 %v139, 2147483648
    %v153 = vmul.f32 %v140, 1.442695
    %v154 = vpow.pop %v153
    %v155 = vmul.f32 %v141, 1.442695
    %v156 = vpow.pop %v155
    %v157 = vmul.f32 %v142, 1.442695
    %v158 = vpow.pop %v157
    %v159 = vmul.f32 %v143, 1.442695
    %v160 = vpow.pop %v159
    %v161 = vmul.f32 %v144, 1.442695
    %v162 = vpow.pop %v161
    %v163 = vmul.f32 %v145, 1.442695
    %v164 = vpow.pop %v163
    %v165 = vmul.f32 %v146, 1.442695
    %v166 = vpow.pop %v165
    %v167 = vmul.f32 %v147, 1.442695
    %v168 = vpow.pop %v167
    %v169 = vmul.f32 %v148, 1.442695
    %v170 = vpow.pop %v169
    %v171 = vmul.f32 %v149, 1.442695
    %v172 = vpow.pop %v171
    %v173 = vmul.f32 %v150, 1.442695
    %v174 = vpow.pop %v173
    %v175 = vmul.f32 %v151, 1.442695
    %v176 = vpow.pop %v175
    %v177 = vmul.f32 %v152, 1.442695
    %v178 = vpow.pop %v177
    %v179 = vadd.f32 %v154, 1.0
    %v180 = vadd.f32 %v156, 1.0
    %v181 = vadd.f32 %v158, 1.0
    %v182 = vadd.f32 %v160, 1.0
    %v183 = vadd.f32 %v162, 1.0
    %v184 = vadd.f32 %v164, 1.0
    %v185 = vadd.f32 %v166, 1.0
    %v186 = vadd.f32 %v168, 1.0
    %v187 = vadd.f32 %v170, 1.0
    %v188 = vadd.f32 %v172, 1.0
    %v189 = vadd.f32 %v174, 1.0
    %v190 = vadd.f32 %v176, 1.0
    %v191 = vadd.f32 %v178, 1.0
    %v192 = vrcp.pop %v179
    %v193 = vmul.f32 %v179, %v192
    %v194 = vsub.f32 1.0, %v193
    %v195 = vmul.f32 %v192, %v194
    %v196 = vadd.f32 %v192, %v195
    %vm197 = vweird.f32 %v179
    %vm198 = vweird.f32 %v192
    %vm199 = vmor %vm197, %vm198
    %v200 = vsel %vm199, %v192, %v196
    %v201 = vand.u32 2147483647, %v179
    %vm202 = vcmp.eq.f32.partialorder %v201, 8.507059e+37
    %v203 = vand.u32 %v179, 2147483648
    %v204 = vor.u32 1.1754944e-38, %v203
    %v205 = vsel %vm202, %v204, %v200
    %v206 = vmul.f32 1.0, %v205
    %v207 = vrcp.pop %v180
    %v208 = vmul.f32 %v180, %v207
    %v209 = vsub.f32 1.0, %v208
    %v210 = vmul.f32 %v207, %v209
    %v211 = vadd.f32 %v207, %v210
    %vm212 = vweird.f32 %v180
    %vm213 = vweird.f32 %v207
    %vm214 = vmor %vm212, %vm213
    %v215 = vsel %vm214, %v207, %v211
    %v216 = vand.u32 2147483647, %v180
    %vm217 = vcmp.eq.f32.partialorder %v216, 8.507059e+37
    %v218 = vand.u32 %v180, 2147483648
    %v219 = vor.u32 1.1754944e-38, %v218
    %v220 = vsel %vm217, %v219, %v215
    %v221 = vmul.f32 1.0, %v220
    %v222 = vrcp.pop %v181
    %v223 = vmul.f32 %v181, %v222
    %v224 = vsub.f32 1.0, %v223
    %v225 = vmul.f32 %v222, %v224
    %v226 = vadd.f32 %v222, %v225
    %vm227 = vweird.f32 %v181
    %vm228 = vweird.f32 %v222
    %vm229 = vmor %vm227, %vm228
    %v230 = vsel %vm229, %v222, %v226
    %v231 = vand.u32 2147483647, %v181
    %vm232 = vcmp.eq.f32.partialorder %v231, 8.507059e+37
    %v233 = vand.u32 %v181, 2147483648
    %v234 = vor.u32 1.1754944e-38, %v233
    %v235 = vsel %vm232, %v234, %v230
    %v236 = vmul.f32 1.0, %v235
    %v237 = vrcp.pop %v182
    %v238 = vmul.f32 %v182, %v237
    %v239 = vsub.f32 1.0, %v238
    %v240 = vmul.f32 %v237, %v239
    %v241 = vadd.f32 %v237, %v240
    %vm242 = vweird.f32 %v182
    %vm243 = vweird.f32 %v237
    %vm244 = vmor %vm242, %vm243
    %v245 = vsel %vm244, %v237, %v241
    %v246 = vand.u32 2147483647, %v182
    %vm247 = vcmp.eq.f32.partialorder %v246, 8.507059e+37
    %v248 = vand.u32 %v182, 2147483648
    %v249 = vor.u32 1.1754944e-38, %v248
    %v250 = vsel %vm247, %v249, %v245
    %v251 = vmul.f32 1.0, %v250
    %v252 = vrcp.pop %v183
    %v253 = vmul.f32 %v183, %v252
    %v254 = vsub.f32 1.0, %v253
    %v255 = vmul.f32 %v252, %v254
    %v256 = vadd.f32 %v252, %v255
    %vm257 = vweird.f32 %v183
    %vm258 = vweird.f32 %v252
    %vm259 = vmor %vm257, %vm258
    %v260 = vsel %vm259, %v252, %v256
    %v261 = vand.u32 2147483647, %v183
    %vm262 = vcmp.eq.f32.partialorder %v261, 8.507059e+37
    %v263 = vand.u32 %v183, 2147483648
    %v264 = vor.u32 1.1754944e-38, %v263
    %v265 = vsel %vm262, %v264, %v260
    %v266 = vmul.f32 1.0, %v265
    %v267 = vrcp.pop %v184
    %v268 = vmul.f32 %v184, %v267
    %v269 = vsub.f32 1.0, %v268
    %v270 = vmul.f32 %v267, %v269
    %v271 = vadd.f32 %v267, %v270
    %vm272 = vweird.f32 %v184
    %vm273 = vweird.f32 %v267
    %vm274 = vmor %vm272, %vm273
    %v275 = vsel %vm274, %v267, %v271
    %v276 = vand.u32 2147483647, %v184
    %vm277 = vcmp.eq.f32.partialorder %v276, 8.507059e+37
    %v278 = vand.u32 %v184, 2147483648
    %v279 = vor.u32 1.1754944e-38, %v278
    %v280 = vsel %vm277, %v279, %v275
    %v281 = vmul.f32 1.0, %v280
    %v282 = vrcp.pop %v185
    %v283 = vmul.f32 %v185, %v282
    %v284 = vsub.f32 1.0, %v283
    %v285 = vmul.f32 %v282, %v284
    %v286 = vadd.f32 %v282, %v285
    %vm287 = vweird.f32 %v185
    %vm288 = vweird.f32 %v282
    %vm289 = vmor %vm287, %vm288
    %v290 = vsel %vm289, %v282, %v286
    %v291 = vand.u32 2147483647, %v185
    %vm292 = vcmp.eq.f32.partialorder %v291, 8.507059e+37
    %v293 = vand.u32 %v185, 2147483648
    %v294 = vor.u32 1.1754944e-38, %v293
    %v295 = vsel %vm292, %v294, %v290
    %v296 = vmul.f32 1.0, %v295
    %v297 = vrcp.pop %v186
    %v298 = vmul.f32 %v186, %v297
    %v299 = vsub.f32 1.0, %v298
    %v300 = vmul.f32 %v297, %v299
    %v301 = vadd.f32 %v297, %v300
    %vm302 = vweird.f32 %v186
    %vm303 = vweird.f32 %v297
    %vm304 = vmor %vm302, %vm303
    %v305 = vsel %vm304, %v297, %v301
    %v306 = vand.u32 2147483647, %v186
    %vm307 = vcmp.eq.f32.partialorder %v306, 8.507059e+37
    %v308 = vand.u32 %v186, 2147483648
    %v309 = vor.u32 1.1754944e-38, %v308
    %v310 = vsel %vm307, %v309, %v305
    %v311 = vmul.f32 1.0, %v310
    %v312 = vrcp.pop %v187
    %v313 = vmul.f32 %v187, %v312
    %v314 = vsub.f32 1.0, %v313
    %v315 = vmul.f32 %v312, %v314
    %v316 = vadd.f32 %v312, %v315
    %vm317 = vweird.f32 %v187
    %vm318 = vweird.f32 %v312
    %vm319 = vmor %vm317, %vm318
    %v320 = vsel %vm319, %v312, %v316
    %v321 = vand.u32 2147483647, %v187
    %vm322 = vcmp.eq.f32.partialorder %v321, 8.507059e+37
    %v323 = vand.u32 %v187, 2147483648
    %v324 = vor.u32 1.1754944e-38, %v323
    %v325 = vsel %vm322, %v324, %v320
    %v326 = vmul.f32 1.0, %v325
    %v327 = vrcp.pop %v188
    %v328 = vmul.f32 %v188, %v327
    %v329 = vsub.f32 1.0, %v328
    %v330 = vmul.f32 %v327, %v329
    %v331 = vadd.f32 %v327, %v330
    %vm332 = vweird.f32 %v188
    %vm333 = vweird.f32 %v327
    %vm334 = vmor %vm332, %vm333
    %v335 = vsel %vm334, %v327, %v331
    %v336 = vand.u32 2147483647, %v188
    %vm337 = vcmp.eq.f32.partialorder %v336, 8.507059e+37
    %v338 = vand.u32 %v188, 2147483648
    %v339 = vor.u32 1.1754944e-38, %v338
    %v340 = vsel %vm337, %v339, %v335
    %v341 = vmul.f32 1.0, %v340
    %v342 = vrcp.pop %v189
    %v343 = vmul.f32 %v189, %v342
    %v344 = vsub.f32 1.0, %v343
    %v345 = vmul.f32 %v342, %v344
    %v346 = vadd.f32 %v342, %v345
    %vm347 = vweird.f32 %v189
    %vm348 = vweird.f32 %v342
    %vm349 = vmor %vm347, %vm348
    %v350 = vsel %vm349, %v342, %v346
    %v351 = vand.u32 2147483647, %v189
    %vm352 = vcmp.eq.f32.partialorder %v351, 8.507059e+37
    %v353 = vand.u32 %v189, 2147483648
    %v354 = vor.u32 1.1754944e-38, %v353
    %v355 = vsel %vm352, %v354, %v350
    %v356 = vmul.f32 1.0, %v355
    %v357 = vrcp.pop %v190
    %v358 = vmul.f32 %v190, %v357
    %v359 = vsub.f32 1.0, %v358
    %v360 = vmul.f32 %v357, %v359
    %v361 = vadd.f32 %v357, %v360
    %vm362 = vweird.f32 %v190
    %vm363 = vweird.f32 %v357
    %vm364 = vmor %vm362, %vm363
    %v365 = vsel %vm364, %v357, %v361
    %v366 = vand.u32 2147483647, %v190
    %vm367 = vcmp.eq.f32.partialorder %v366, 8.507059e+37
    %v368 = vand.u32 %v190, 2147483648
    %v369 = vor.u32 1.1754944e-38, %v368
    %v370 = vsel %vm367, %v369, %v365
    %v371 = vmul.f32 1.0, %v370
    %v372 = vrcp.pop %v191
    %v373 = vmul.f32 %v191, %v372
    %v374 = vsub.f32 1.0, %v373
    %v375 = vmul.f32 %v372, %v374
    %v376 = vadd.f32 %v372, %v375
    %vm377 = vweird.f32 %v191
    %vm378 = vweird.f32 %v372
    %vm379 = vmor %vm377, %vm378
    %v380 = vsel %vm379, %v372, %v376
    %v381 = vand.u32 2147483647, %v191
    %vm382 = vcmp.eq.f32.partialorder %v381, 8.507059e+37
    %v383 = vand.u32 %v191, 2147483648
    %v384 = vor.u32 1.1754944e-38, %v383
    %v385 = vsel %vm382, %v384, %v380
    %v386 = vmul.f32 1.0, %v385
    %v387 = vpack.c.bf16 %v221, %v206
    %v388 = vpack.c.bf16 %v251, %v236
    %v389 = vpack.c.bf16 %v281, %v266
    %v390 = vpack.c.bf16 %v311, %v296
    %v391 = vpack.c.bf16 %v341, %v326
    %v392 = vpack.c.bf16 %v371, %v356
    %v393 = vpack.c.bf16 %v386, %v386
    %v394 = vld [vmem:[%s3] sm:$0xf]
    %v395 = vld [vmem:[%s3 + $0x4] sm:$0xf]
    %v396 = vld [vmem:[%s3 + $0x8] sm:$0xf]
    %v397 = vld [vmem:[%s3 + $0xc] sm:$0xf]
    %v398 = vld [vmem:[%s4] sm:$0x1]
    %v400 = vperm.slane %v398, 0
    %v406 = vunpack.c.l.b16 %v394
    %v407 = vunpack.c.l.b16 %v395
    %v408 = vunpack.c.l.b16 %v396
    %v409 = vunpack.c.l.b16 %v397
    %v410 = vpack.c.b16 %v407, %v406
    %v411 = vpack.c.b16 %v409, %v408
    %vm414 = vcmask 261120
    %v416 = vsel %vm414, %v387, 0
    %v419 = vsel %vm414, %v388, 0
    %v422 = vsel %vm414, %v389, 0
    %v425 = vsel %vm414, %v390, 0
    %v428 = vsel %vm414, %v391, 0
    %v431 = vsel %vm414, %v392, 0
    %v434 = vsel %vm414, %v393, 0
    %436 = vmatpush.bf16.msra.mxu0 0
    %437 = vmatpush.bf16.msra.mxu0 0
    %438 = vmatpush.bf16.msra.mxu0 0
    %439 = vmatpush.bf16.msra.mxu0 0
    %440 = vmatpush.bf16.msra.mxu0 0
    %441 = vmatpush.bf16.msra.mxu0 0
    %442 = vmatpush.bf16.msra.mxu0 %v411
    %443 = vmatpush.bf16.msra.mxu0 %v410
    %444 = vmatmul.bf16.gmra.mxu0 %v416
    %v445 = vpop.f32.mrf.mxu0
    %v446 = vadd.f32 %v400, %v445
    %v447 = vpop.f32.mrf.mxu0
    %v448 = vadd.f32 %v400, %v447
    %449 = vmatmul.bf16.gmra.mxu0 %v419
    %v450 = vpop.f32.mrf.mxu0
    %v451 = vadd.f32 %v400, %v450
    %v452 = vpop.f32.mrf.mxu0
    %v453 = vadd.f32 %v400, %v452
    %454 = vmatmul.bf16.gmra.mxu0 %v422
    %v455 = vpop.f32.mrf.mxu0
    %v456 = vadd.f32 %v400, %v455
    %v457 = vpop.f32.mrf.mxu0
    %v458 = vadd.f32 %v400, %v457
    %459 = vmatmul.bf16.gmra.mxu0 %v425
    %v460 = vpop.f32.mrf.mxu0
    %v461 = vadd.f32 %v400, %v460
    %v462 = vpop.f32.mrf.mxu0
    %v463 = vadd.f32 %v400, %v462
    %464 = vmatmul.bf16.gmra.mxu0 %v428
    %v465 = vpop.f32.mrf.mxu0
    %v466 = vadd.f32 %v400, %v465
    %v467 = vpop.f32.mrf.mxu0
    %v468 = vadd.f32 %v400, %v467
    %469 = vmatmul.bf16.gmra.mxu0 %v431
    %v470 = vpop.f32.mrf.mxu0
    %v471 = vadd.f32 %v400, %v470
    %v472 = vpop.f32.mrf.mxu0
    %v473 = vadd.f32 %v400, %v472
    %474 = vmatmul.bf16.gmra.mxu0 %v434
    %v475 = vpop.f32.mrf.mxu0
    %v476 = vadd.f32 %v400, %v475
    %v477 = vpop.f32.mrf.mxu0
    %478 = vdwg.mxu0
    %v479 = vmax.f32 %v446, 0.0
    %v480 = vmax.f32 %v448, 0.0
    %v481 = vmax.f32 %v451, 0.0
    %v482 = vmax.f32 %v453, 0.0
    %v483 = vmax.f32 %v456, 0.0
    %v484 = vmax.f32 %v458, 0.0
    %v485 = vmax.f32 %v461, 0.0
    %v486 = vmax.f32 %v463, 0.0
    %v487 = vmax.f32 %v466, 0.0
    %v488 = vmax.f32 %v468, 0.0
    %v489 = vmax.f32 %v471, 0.0
    %v490 = vmax.f32 %v473, 0.0
    %v491 = vmax.f32 %v476, 0.0
    %v492 = vpack.c.bf16 %v480, %v479
    %v493 = vpack.c.bf16 %v482, %v481
    %v494 = vpack.c.bf16 %v484, %v483
    %v495 = vpack.c.bf16 %v486, %v485
    %v496 = vpack.c.bf16 %v488, %v487
    %v497 = vpack.c.bf16 %v490, %v489
    %v498 = vpack.c.bf16 %v491, %v491
    %v499 = vld [vmem:[%s5] sm:$0xf]
    %v500 = vld [vmem:[%s5 + $0x4] sm:$0xf]
    %v501 = vld [vmem:[%s5 + $0x8] sm:$0xf]
    %v502 = vld [vmem:[%s5 + $0xc] sm:$0xf]
    %v503 = vld [vmem:[%s6] sm:$0x1]
    %v505 = vperm.slane %v503, 0
    %v511 = vunpack.c.l.b16 %v499
    %v512 = vunpack.c.l.b16 %v500
    %v513 = vunpack.c.l.b16 %v501
    %v514 = vunpack.c.l.b16 %v502
    %v515 = vpack.c.b16 %v512, %v511
    %v516 = vpack.c.b16 %v514, %v513
    %v520 = vsel %vm414, %v492, 0
    %v523 = vsel %vm414, %v493, 0
    %v526 = vsel %vm414, %v494, 0
    %v529 = vsel %vm414, %v495, 0
    %v532 = vsel %vm414, %v496, 0
    %v535 = vsel %vm414, %v497, 0
    %v538 = vsel %vm414, %v498, 0
    %540 = vmatpush.bf16.msra.mxu0 0
    %541 = vmatpush.bf16.msra.mxu0 0
    %542 = vmatpush.bf16.msra.mxu0 0
    %543 = vmatpush.bf16.msra.mxu0 0
    %544 = vmatpush.bf16.msra.mxu0 0
    %545 = vmatpush.bf16.msra.mxu0 0
    %546 = vmatpush.bf16.msra.mxu0 %v516
    %547 = vmatpush.bf16.msra.mxu0 %v515
    %548 = vmatmul.bf16.gmra.mxu0 %v520
    %v549 = vpop.f32.mrf.mxu0
    %v550 = vadd.f32 %v505, %v549
    %v551 = vpop.f32.mrf.mxu0
    %v552 = vadd.f32 %v505, %v551
    %553 = vmatmul.bf16.gmra.mxu0 %v523
    %v554 = vpop.f32.mrf.mxu0
    %v555 = vadd.f32 %v505, %v554
    %v556 = vpop.f32.mrf.mxu0
    %v557 = vadd.f32 %v505, %v556
    %558 = vmatmul.bf16.gmra.mxu0 %v526
    %v559 = vpop.f32.mrf.mxu0
    %v560 = vadd.f32 %v505, %v559
    %v561 = vpop.f32.mrf.mxu0
    %v562 = vadd.f32 %v505, %v561
    %563 = vmatmul.bf16.gmra.mxu0 %v529
    %v564 = vpop.f32.mrf.mxu0
    %v565 = vadd.f32 %v505, %v564
    %v566 = vpop.f32.mrf.mxu0
    %v567 = vadd.f32 %v505, %v566
    %568 = vmatmul.bf16.gmra.mxu0 %v532
    %v569 = vpop.f32.mrf.mxu0
    %v570 = vadd.f32 %v505, %v569
    %v571 = vpop.f32.mrf.mxu0
    %v572 = vadd.f32 %v505, %v571
    %573 = vmatmul.bf16.gmra.mxu0 %v535
    %v574 = vpop.f32.mrf.mxu0
    %v575 = vadd.f32 %v505, %v574
    %v576 = vpop.f32.mrf.mxu0
    %v577 = vadd.f32 %v505, %v576
    %578 = vmatmul.bf16.gmra.mxu0 %v538
    %v579 = vpop.f32.mrf.mxu0
    %v580 = vadd.f32 %v505, %v579
    %v581 = vpop.f32.mrf.mxu0
    %582 = vdwg.mxu0
    %583 = vst [vmem:[#allocation2] sm:$0xff] %v550
    %584 = vst [vmem:[#allocation2 + $0x8] sm:$0xff] %v552
    %585 = vst [vmem:[#allocation2 + $0x10] sm:$0xff] %v555
    %586 = vst [vmem:[#allocation2 + $0x18] sm:$0xff] %v557
    %587 = vst [vmem:[#allocation2 + $0x20] sm:$0xff] %v560
    %588 = vst [vmem:[#allocation2 + $0x28] sm:$0xff] %v562
    %589 = vst [vmem:[#allocation2 + $0x30] sm:$0xff] %v565
    %590 = vst [vmem:[#allocation2 + $0x38] sm:$0xff] %v567
    %591 = vst [vmem:[#allocation2 + $0x40] sm:$0xff] %v570
    %592 = vst [vmem:[#allocation2 + $0x48] sm:$0xff] %v572
    %593 = vst [vmem:[#allocation2 + $0x50] sm:$0xff] %v575
    %594 = vst [vmem:[#allocation2 + $0x58] sm:$0xff] %v577
    %595 = vst [vmem:[#allocation2 + $0x60] sm:$0xf] %v580
    // Predicated region
    $region30: #{tpu_custom_call.1} parent=1 // pred_check
      _
    $region31: #{tpu_custom_call.1} parent=1 // pred_check_branch
      %597 = sbr.rel (0) target = $region33
    $region32: #{tpu_custom_call.1} parent=1 // pred_region
      %599 = vsyncadd [#allocation3], 0
      %s600 = sshll.u32 [#allocation2], 4
      %s601 = int_to_ptr.vmem [resolvable:$true] %s600
      %s602 = sshll.u32 %s7, 4
      %s603 = int_to_ptr.hbm [resolvable:$true] %s602
      %608 = dma.vmem_to_hbm [thread:$0]  %s601, 1664, %s603, [#allocation3], 128, 128, 8
    $region33: #{tpu_custom_call.1} parent=1 // pred_fallthru
      _
    // Predicated region
    $region34: #{tpu_custom_call.1} parent=1 // pred_check
      _
    $region35: #{tpu_custom_call.1} parent=1 // pred_check_branch
      %610 = sbr.rel (0) target = $region37
    $region36: #{tpu_custom_call.1} parent=1 // pred_region
      %612 = dma.done [#allocation3], 1664
    $region37: #{tpu_custom_call.1} parent=1 // pred_fallthru
      _
    %613 = vsyncpa [#allocation3], 1

</llo_original>
